<compile_context>
chip_gen: v6e
topology: v6e:2x2x1
jax: 0.10.0
libtpu: 0.0.40
codegen_flags: <defaults>
</compile_context>

<pallas_src>
import math

import jax
import jax.numpy as jnp
from jax import lax
from jax.experimental import pallas as pl
from jax.experimental.pallas import tpu as pltpu


def _round_up(x, m):
    return ((x + m - 1) // m) * m


def _pick_tile(n, cap):
    """Largest power-of-two tile <= cap that divides n (fallback: full extent)."""
    for t in (512, 256, 128, 64, 32, 16, 8):
        if t <= cap and n % t == 0:
            return t
    return n  # block == full array dim is always a legal block shape


def graph_attention_forward(h, W, adj=None, *, matmul_dtype=jnp.bfloat16,
                            block_q=None, block_k=None):
    """Pallas implementation of GraphAttentionLayer.forward.

    h:   (N, F_in)  float32
    W:   (F_in, F_out) float32
    adj: unused (matches the PyTorch forward, which ignores it).
    matmul_dtype: MXU operand dtype (bf16 recommended on v5e/v6e/v7x);
                  accumulation and softmax bookkeeping are always f32.
    """
    del adj  # unused in the reference forward pass
    N, f_in = h.shape
    f_in_w, f_out = W.shape
    assert f_in == f_in_w, "in_features mismatch"
    # TODO(synk): the PyTorch forward re-initializes W when h.size(1) != W.size(0)
    # (a stateful Parameter reset); here we assert shape compatibility instead.

    # Lane-dense feature axis: pad F_out up to a multiple of 128 with zero
    # columns (zeros do not change Wh @ Wh.T nor the real output columns).
    f_pad = max(_round_up(f_out, 128), 128)
    W_pad = W if f_pad == f_out else jnp.pad(W, ((0, 0), (0, f_pad - f_out)))

    if block_q is None:
        block_q = _pick_tile(N, 256)
    if block_k is None:
        block_k = _pick_tile(N, 512)
    assert N % block_q == 0 and N % block_k == 0, "tile sizes must divide N"

    wh_dtype = jnp.dtype(matmul_dtype)

    # ---------------- Kernel 1: Wh = h @ W (row tiled) ----------------
    def _wh_kernel(h_ref, w_ref, o_ref):
        o_ref[...] = jnp.dot(
            h_ref[...].astype(matmul_dtype),
            w_ref[...].astype(matmul_dtype),
            preferred_element_type=jnp.float32,
        ).astype(o_ref.dtype)

    wh = pl.pallas_call(
        _wh_kernel,
        out_shape=jax.ShapeDtypeStruct((N, f_pad), wh_dtype),
        grid_spec=pltpu.PrefetchScalarGridSpec(
            num_scalar_prefetch=0,
            grid=(N // block_q,),
            in_specs=[
                pl.BlockSpec((block_q, f_in), lambda i: (i, 0)),
                pl.BlockSpec((f_in, f_pad), lambda i: (0, 0)),
            ],
            out_specs=pl.BlockSpec((block_q, f_pad), lambda i: (i, 0)),
        ),
        compiler_params=pltpu.CompilerParams(
            dimension_semantics=("parallel",),
        ),
    )(h, W_pad)

    # ---------------- Kernel 2: flash-style attention over Wh ----------------
    def _attn_kernel(whq_ref, whk_ref, o_ref, m_ref, l_ref, acc_ref):
        ki = pl.program_id(1)

        @pl.when(ki == 0)
        def _init():
            m_ref[...] = jnp.full(m_ref.shape, -jnp.inf, dtype=jnp.float32)
            l_ref[...] = jnp.zeros(l_ref.shape, dtype=jnp.float32)
            acc_ref[...] = jnp.zeros(acc_ref.shape, dtype=jnp.float32)

        wh_q = whq_ref[...].astype(matmul_dtype)
        wh_k = whk_ref[...].astype(matmul_dtype)

        # e = LeakyReLU_0.2(Wh_q @ Wh_k^T): contract the feature axis directly,
        # no materialized transpose of the (tk, F) tile.
        s = lax.dot_general(
            wh_q, wh_k,
            dimension_numbers=(((1,), (1,)), ((), ())),
            preferred_element_type=jnp.float32,
        )
        s = jnp.where(s > 0, s, 0.2 * s)

        # Online softmax (f32 bookkeeping), unnormalized accumulation.
        m_prev = m_ref[...]
        m_new = jnp.maximum(m_prev, jnp.max(s, axis=1, keepdims=True))
        alpha = jnp.exp(m_prev - m_new)
        p = jnp.exp(s - m_new)

        l_ref[...] = alpha * l_ref[...] + jnp.sum(p, axis=1, keepdims=True)
        acc_ref[...] = alpha * acc_ref[...] + lax.dot_general(
            p.astype(matmul_dtype), wh_k,
            dimension_numbers=(((1,), (0,)), ((), ())),
            preferred_element_type=jnp.float32,
        )
        m_ref[...] = m_new

        @pl.when(ki == pl.num_programs(1) - 1)
        def _finalize():
            # Deferred normalization: one (tq, F) scale instead of (tq, N).
            inv_l = pl.reciprocal(l_ref[...], approx=True)
            o_ref[...] = (acc_ref[...] * inv_l).astype(o_ref.dtype)

    grid = (N // block_q, N // block_k)
    itemsize_wh = wh_dtype.itemsize

    # VMEM budget: double-buffered Wh tiles + double-buffered output tile +
    # scratch accumulators + score/prob temporaries (with headroom).
    vmem_est = (
        2 * (block_q + block_k) * f_pad * itemsize_wh
        + 2 * block_q * f_pad * 4
        + block_q * f_pad * 4 + 2 * block_q * 4
        + 4 * block_q * block_k * 4
    )
    vmem_limit = int(min(max(2 * vmem_est, 8 * 1024 * 1024), 32 * 1024 * 1024))

    cost = pl.CostEstimate(
        flops=4 * N * N * f_pad,          # score matmul + p@Wh matmul
        transcendentals=N * N + N,        # exp per score + reciprocal per row
        bytes_accessed=(
            N * f_pad * itemsize_wh                     # q-side Wh (resident per row tile)
            + (N // block_q) * N * f_pad * itemsize_wh  # k-side Wh re-streamed per row tile
            + N * f_pad * 4                             # output
        ),
    )

    out_pad = pl.pallas_call(
        _attn_kernel,
        out_shape=jax.ShapeDtypeStruct((N, f_pad), jnp.float32),
        grid_spec=pltpu.PrefetchScalarGridSpec(
            num_scalar_prefetch=0,
            grid=grid,
            in_specs=[
                pl.BlockSpec((block_q, f_pad), lambda qi, ki: (qi, 0)),
                pl.BlockSpec((block_k, f_pad), lambda qi, ki: (ki, 0)),
            ],
            out_specs=pl.BlockSpec((block_q, f_pad), lambda qi, ki: (qi, 0)),
            scratch_shapes=[
                pltpu.VMEM((block_q, 1), jnp.float32),      # running max m
                pltpu.VMEM((block_q, 1), jnp.float32),      # running denom l
                pltpu.VMEM((block_q, f_pad), jnp.float32),  # output accumulator
            ],
        ),
        compiler_params=pltpu.CompilerParams(
            dimension_semantics=("parallel", "arbitrary"),
            vmem_limit_bytes=vmem_limit,
        ),
        cost_estimate=cost,
    )(wh, wh)

    return out_pad[:, :f_out]


def _xavier_uniform(key, shape):
    fan_in, fan_out = shape[0], shape[1]
    bound = math.sqrt(6.0 / (fan_in + fan_out))
    return jax.random.uniform(
        key, shape, dtype=jnp.float32, minval=-bound, maxval=bound
    )


if __name__ == "__main__":
    # Small shapes consistent with the module: N nodes, in/out features.
    N, IN_FEATURES, OUT_FEATURES = 256, 48, 96

    key = jax.random.PRNGKey(0)
    k_h, k_w, k_a, k_adj = jax.random.split(key, 4)

    # Deterministic parameter init (mirrors reset_parameters / xavier_uniform_).
    W = _xavier_uniform(k_w, (IN_FEATURES, OUT_FEATURES))
    a = _xavier_uniform(k_a, (2 * OUT_FEATURES, 1))  # unused in forward (parity only)

    # Inputs
    h = jax.random.normal(k_h, (N, IN_FEATURES), dtype=jnp.float32)
    adj = (jax.random.uniform(k_adj, (N, N)) > 0.5).astype(jnp.float32)  # ignored

    # Pure-JAX f32 reference of the same math.
    wh_ref = h @ W
    e_ref = wh_ref @ wh_ref.T
    e_ref = jnp.where(e_ref > 0, e_ref, 0.2 * e_ref)
    attn_ref = jax.nn.softmax(e_ref, axis=1)
    out_ref = attn_ref @ wh_ref

    # 1) Default bf16 MXU operands; small tiles so the online-softmax path
    #    actually iterates over multiple kv tiles (grid = (4, 4)).
    out_bf16 = graph_attention_forward(h, W, adj, block_q=64, block_k=64)
    out_bf16 = jax.block_until_ready(out_bf16)
    assert out_bf16.shape == (N, OUT_FEATURES)
    assert jnp.allclose(out_bf16, out_ref, atol=5e-2, rtol=5e-2)

    # 2) f32 MXU operands with default (larger) tiles; tighter tolerance.
    out_f32 = graph_attention_forward(h, W, adj, matmul_dtype=jnp.float32)
    out_f32 = jax.block_until_ready(out_f32)
    assert out_f32.shape == (N, OUT_FEATURES)
    assert jnp.allclose(out_f32, out_ref, atol=5e-3, rtol=5e-3)

    print("KERNEL_OK")
</pallas_src>

<mosaic_0001>
module attributes {stable_mosaic.version = 11 : i64} {
  func.func @_wh_kernel(%arg0: i32, %arg1: memref<64x48xf32, #tpu.memory_space<vmem>>, %arg2: memref<48x128xf32, #tpu.memory_space<vmem>>, %arg3: memref<64x128xbf16, #tpu.memory_space<vmem>>) attributes {dimension_semantics = [#tpu.dimension_semantics<parallel>], iteration_bounds = array<i64: 4>, scalar_prefetch = 0 : i64, scratch_operands = 0 : i64, tpu.core_type = #tpu.core_type<tc>, window_params = [{transform_indices = @transform_0, window_bounds = array<i64: 64, 48>}, {pipeline_mode = #tpu.pipeline_mode<synchronous>, transform_indices = @transform_1, window_bounds = array<i64: 48, 128>}, {transform_indices = @transform_2, window_bounds = array<i64: 64, 128>}]} {
    %c0 = arith.constant 0 : index
    %c0_0 = arith.constant 0 : index
    %0 = vector.load %arg1[%c0, %c0_0] : memref<64x48xf32, #tpu.memory_space<vmem>>, vector<64x48xf32>
    %1 = arith.truncf %0 : vector<64x48xf32> to vector<64x48xbf16>
    %c0_1 = arith.constant 0 : index
    %c0_2 = arith.constant 0 : index
    %2 = vector.load %arg2[%c0_1, %c0_2] : memref<48x128xf32, #tpu.memory_space<vmem>>, vector<48x128xf32>
    %3 = arith.truncf %2 : vector<48x128xf32> to vector<48x128xbf16>
    %cst = arith.constant dense<0.000000e+00> : vector<64x128xf32>
    %4 = tpu.matmul %1, %3, %cst {dimension_numbers = #tpu.dot_dimension_numbers<[1], [0], [0], [1], [0, 0, 1, 1], [], []>} : vector<64x48xbf16>, vector<48x128xbf16>, vector<64x128xf32> -> vector<64x128xf32>
    %5 = arith.truncf %4 : vector<64x128xf32> to vector<64x128xbf16>
    %c0_3 = arith.constant 0 : index
    %c0_4 = arith.constant 0 : index
    %6 = vector.load %arg3[%c0_3, %c0_4] : memref<64x128xbf16, #tpu.memory_space<vmem>>, vector<64x128xbf16>
    tpu.vector_store %arg3[%c0_3, %c0_4], %5 {strides = array<i32>} : memref<64x128xbf16, #tpu.memory_space<vmem>>, vector<64x128xbf16>,
    return
  }
  func.func @transform_0(%arg0: i32) -> (i32, i32) {
    %c0_i32 = arith.constant 0 : i32
    %c0_i32_0 = arith.constant 0 : i32
    return %arg0, %c0_i32 : i32, i32
  }
  func.func @transform_1(%arg0: i32) -> (i32, i32) {
    %c0_i32 = arith.constant 0 : i32
    %c0_i32_0 = arith.constant 0 : i32
    %c0_i32_1 = arith.constant 0 : i32
    return %c0_i32, %c0_i32_0 : i32, i32
  }
  func.func @transform_2(%arg0: i32) -> (i32, i32) {
    %c0_i32 = arith.constant 0 : i32
    %c0_i32_0 = arith.constant 0 : i32
    return %arg0, %c0_i32 : i32, i32
  }
}

</mosaic_0001>

<llo_original>
// kernel: tpu_custom_call.1
$region0: #{tpu_custom_call.1}
  #allocation0 [shape = 'u32[]', space=smem, size = 0x4, offset = 0x4, fixed_abs, tag = 'smem constant byte address 0x4 - core index']
  #allocation1 [shape = 'u32[144,128]{1,0:T(1,128)}', space=vmem, size = 0x12000, scoped, tag = 'internal scratch']
  %s0 = inlined_call_operand.vmem [shape: f32[256,48], index: 0, kind: input, shape index: {}]
  %s1 = inlined_call_operand.vmem [shape: f32[48,128], index: 1, kind: input, shape index: {}]
  %s2 = inlined_call_operand.hbm [shape: bf16[256,128], index: 2, kind: output, shape index: {}]
  %s3 = sld [smem:[#allocation0]]
  $region41: #{tpu_custom_call.1} parent=0
    _
  %s5 = ssub.s32 1, %s3
  %s6 = scalar_select 0, %s5, %s3
  $region1: #{tpu_custom_call.1} parent=0
    #allocation2 [shape = 'u8[32768]{0}', space=vmem, size = 0x8000, scoped, tag = 'output window, operand 0']
    #allocation3 [shape = 's32[2]{0}', space=sflag, size = 0x8, scoped, tag = 'scoped memory for tpu_custom_call.1']
    %7 = vsyncpa [#allocation3], 0
    %s8 = scalar_lea.sflag [#allocation3], 1
    %9 = vsyncpa %s8, 0
    loop: start=0, step=1, limit=6
    $region2: #{tpu_custom_call.1} parent=1 // loop_pre_header
      _
    $region3: #{tpu_custom_call.1} parent=1 // loop_header
      %s11 = sphi 0, %s15
      %p12 = scmp.ge.s32.totalorder %s11, 6
      %s21 = sphi 0, %s23
      %s24 = sphi 0, %s21
      %s25 = sphi 0, %s24
      %s41 = sphi 0, %s25
      %s45 = sphi 0, %s45
      %s47 = sphi 0, %s45
      %s48 = sphi 0, %s47
      %s62 = sphi 0, %s48
      %s68 = sphi 0, %s70
      %s71 = sphi 0, %s68
      %s72 = sphi 0, %s71
      %s88 = sphi 0, %s72
    $region4: #{tpu_custom_call.1} parent=1 // loop_header_branch
      %14 = sbr.rel (%p12) target = $region8
    $region5: #{tpu_custom_call.1} parent=1 // loop_body
      %s16 = ssub.s32 %s11, 1
      %s17 = ssub.s32 %s11, 2
      %s18 = sadd.s32 %s11, 1
      %s19 = ssub.s32 %s11, %s18
      %p20 = scmp.eq.s32.totalorder %s19, 0
      %s22 = sadd.s32 %s21, 1
      %s23 = scalar_select %p20, %s21, %s22
      %p26 = pneg %p20
      %p27 = scmp.eq.s32.totalorder %s11, 3
      %p28 = por %p26, %p27
      %p29 = scmp.ne.s32.totalorder %s21, %s24
      %p30 = scmp.eq.s32.totalorder %s11, 0
      %p31 = por %p29, %p30
      %p32 = scmp.ne.s32.totalorder %s21, %s24
      %p33 = scmp.eq.s32.totalorder %s16, 3
      %p34 = por %p32, %p33
      %p35 = scmp.ne.s32.totalorder %s24, %s25
      %p36 = scmp.eq.s32.totalorder %s16, 0
      %p37 = por %p35, %p36
      %p38 = scmp.ne.s32.totalorder %s24, %s25
      %p39 = scmp.eq.s32.totalorder %s17, 3
      %p40 = por %p38, %p39
      %p42 = scmp.ne.s32.totalorder %s25, %s41
      %p43 = scmp.eq.s32.totalorder %s17, 0
      %p44 = por %p42, %p43
      %s46 = sadd.s32 %s45, 1
      %p49 = scmp.eq.s32.totalorder %s11, 3
      %p50 = scmp.ne.s32.totalorder %s45, %s47
      %p51 = scmp.eq.s32.totalorder %s11, 0
      %p52 = por %p50, %p51
      %p53 = scmp.ne.s32.totalorder %s45, %s47
      %p54 = scmp.eq.s32.totalorder %s16, 3
      %p55 = por %p53, %p54
      %p56 = scmp.ne.s32.totalorder %s47, %s48
      %p57 = scmp.eq.s32.totalorder %s16, 0
      %p58 = por %p56, %p57
      %p59 = scmp.ne.s32.totalorder %s47, %s48
      %p60 = scmp.eq.s32.totalorder %s17, 3
      %p61 = por %p59, %p60
      %p63 = scmp.ne.s32.totalorder %s48, %s62
      %p64 = scmp.eq.s32.totalorder %s17, 0
      %p65 = por %p63, %p64
      %s66 = ssub.s32 %s11, %s18
      %p67 = scmp.eq.s32.totalorder %s66, 0
      %s69 = sadd.s32 %s68, 1
      %s70 = scalar_select %p67, %s68, %s69
      %p73 = pneg %p67
      %p74 = scmp.eq.s32.totalorder %s11, 3
      %p75 = por %p73, %p74
      %p76 = scmp.ne.s32.totalorder %s68, %s71
      %p77 = scmp.eq.s32.totalorder %s11, 0
      %p78 = por %p76, %p77
      %p79 = scmp.ne.s32.totalorder %s68, %s71
      %p80 = scmp.eq.s32.totalorder %s16, 3
      %p81 = por %p79, %p80
      %p82 = scmp.ne.s32.totalorder %s71, %s72
      %p83 = scmp.eq.s32.totalorder %s16, 0
      %p84 = por %p82, %p83
      %p85 = scmp.ne.s32.totalorder %s71, %s72
      %p86 = scmp.eq.s32.totalorder %s17, 3
      %p87 = por %p85, %p86
      %p89 = scmp.ne.s32.totalorder %s72, %s88
      %p90 = scmp.eq.s32.totalorder %s17, 0
      %p91 = por %p89, %p90
      %p92 = scmp.le.s32.totalorder 1, %s11
      %p93 = scmp.lt.s32.totalorder %s11, 5
      %p94 = pnand %p92, %p93
      %p95 = pneg %p94
      // Predicated region
      $region9: #{tpu_custom_call.1} parent=5 // pred_check
        _
      $region10: #{tpu_custom_call.1} parent=5 // pred_check_branch
        %97 = sbr.rel (%p94) target = $region12
      $region11: #{tpu_custom_call.1} parent=5 // pred_region
        %s98 = ssub.s32 %s11, 1
        // Predicated region
        $region13: #{tpu_custom_call.1} parent=11 // pred_check
          %p99 = pneg %p58
        $region14: #{tpu_custom_call.1} parent=11 // pred_check_branch
          %101 = sbr.rel (%p99) target = $region16
        $region15: #{tpu_custom_call.1} parent=11 // pred_region
          _
        $region16: #{tpu_custom_call.1} parent=11 // pred_fallthru
          _
      $region12: #{tpu_custom_call.1} parent=5 // pred_fallthru
        _
      %p102 = scmp.lt.s32.totalorder %s11, 4
      // Predicated region
      $region17: #{tpu_custom_call.1} parent=5 // pred_check
        %p103 = pneg %p102
      $region18: #{tpu_custom_call.1} parent=5 // pred_check_branch
        %105 = sbr.rel (%p103) target = $region20
      $region19: #{tpu_custom_call.1} parent=5 // pred_region
        // Predicated region
        $region21: #{tpu_custom_call.1} parent=19 // pred_check
          %p106 = pneg %p31
        $region22: #{tpu_custom_call.1} parent=19 // pred_check_branch
          %108 = sbr.rel (%p106) target = $region24
        $region23: #{tpu_custom_call.1} parent=19 // pred_region
          %s109 = smul.u32 8, %s11
          %p110 = scmp.lt.s32.totalorder %s109, 31
          %s111 = scalar_select %p110, %s109, 31
          %s112 = smul.addr %s111, 8
          %s113 = scalar_lea.vmem %s0, %s112
          %s114 = smul.u32 8, %s11
        $region24: #{tpu_custom_call.1} parent=19 // pred_fallthru
          _
      $region20: #{tpu_custom_call.1} parent=5 // pred_fallthru
        _
      %p115 = scmp.le.s32.totalorder 1, %s11
      %p116 = scmp.lt.s32.totalorder %s11, 5
      %p117 = pnand %p115, %p116
      %p118 = pneg %p117
      // Predicated region
      $region25: #{tpu_custom_call.1} parent=5 // pred_check
        _
      $region26: #{tpu_custom_call.1} parent=5 // pred_check_branch
        %120 = sbr.rel (%p117) target = $region28
      $region27: #{tpu_custom_call.1} parent=5 // pred_region
        %s121 = ssub.s32 %s11, 1
        %s122 = smul.u32 8, %s16
        %p123 = scmp.lt.s32.totalorder %s122, 31
        %s124 = scalar_select %p123, %s122, 31
        %s125 = smul.addr %s124, 8
        %s126 = scalar_lea.vmem %s0, %s125
        %p127 = pneg %p37
        %p128 = pneg %p34
        %p129 = pneg %p58
        %p130 = pneg %p55
        %p131 = pneg %p84
        %p132 = pneg %p81
        %s133 = sand.u32 %s71, 1
        %s134 = scalar_lea.sflag [#allocation3], %s133
        %s135 = sand.u32 %s71, 1
        %s136 = smul.addr %s135, 32
        %s137 = scalar_lea.vmem [#allocation2], %s136
        %s138 = smul.u32 8, %s16
        %p139 = scmp.lt.s32.totalorder %s138, 31
        %s140 = scalar_select %p139, %s138, 31
        %s141 = smul.addr %s140, 8
        %s142 = scalar_lea.vmem %s0, %s141
        %s143 = smul.u32 8, %s16
        %s144 = smul.u32 8, %s16
        %v146 = vld [vmem:[%s142] sm:$0xff]
        %v147 = vld [vmem:[%s142 + $0x8] sm:$0xff]
        %v148 = vld [vmem:[%s142 + $0x10] sm:$0xff]
        %v149 = vld [vmem:[%s142 + $0x18] sm:$0xff]
        %v150 = vld [vmem:[%s142 + $0x20] sm:$0xff]
        %v151 = vld [vmem:[%s142 + $0x28] sm:$0xff]
        %v152 = vld [vmem:[%s142 + $0x30] sm:$0xff]
        %v153 = vld [vmem:[%s142 + $0x38] sm:$0xff]
        %v154 = vpack.c.bf16 %v147, %v146
        %v155 = vpack.c.bf16 %v149, %v148
        %v156 = vpack.c.bf16 %v151, %v150
        %v157 = vpack.c.bf16 %v153, %v152
        %v158 = vld [vmem:[%s1] sm:$0xff]
        %v159 = vld [vmem:[%s1 + $0x8] sm:$0xff]
        %v160 = vld [vmem:[%s1 + $0x10] sm:$0xff]
        %v161 = vld [vmem:[%s1 + $0x18] sm:$0xff]
        %v162 = vld [vmem:[%s1 + $0x20] sm:$0xff]
        %v163 = vld [vmem:[%s1 + $0x28] sm:$0xff]
        %v164 = vpack.c.bf16 %v159, %v158
        %v165 = vpack.c.bf16 %v161, %v160
        %v166 = vpack.c.bf16 %v163, %v162
        %vm167 = vcmask 392192
        %v169 = vsel %vm167, %v154, 0
        %v172 = vsel %vm167, %v155, 0
        %v175 = vsel %vm167, %v156, 0
        %v178 = vsel %vm167, %v157, 0
        %180 = vmatprep.subr.bf16.mxu0 0
        %181 = vmatpush1.bf16.msra.mxu0 0
        %182 = vmatprep.subr.bf16.mxu0 0
        %183 = vmatpush1.bf16.msra.mxu0 0
        %184 = vmatprep.subr.bf16.mxu0 0
        %185 = vmatpush1.bf16.msra.mxu0 0
        %186 = vmatprep.subr.bf16.mxu0 0
        %187 = vmatpush1.bf16.msra.mxu0 0
        %188 = vmatprep.subr.bf16.mxu0 0
        %189 = vmatpush1.bf16.msra.mxu0 0
        %190 = vmatprep.subr.bf16.mxu0 0
        %191 = vmatpush1.bf16.msra.mxu0 %v166
        %192 = vmatprep.subr.bf16.mxu0 0
        %193 = vmatpush1.bf16.msra.mxu0 %v165
        %194 = vmatprep.subr.bf16.mxu0 0
        %195 = vmatpush1.bf16.msra.mxu0 %v164
        %196 = vmatprep.subr.bf16.mxu0 0
        %197 = vmatpush2.bf16.msra.mxu0 0
        %198 = vmatprep.subr.bf16.mxu0 0
        %199 = vmatpush2.bf16.msra.mxu0 0
        %200 = vmatprep.subr.bf16.mxu0 0
        %201 = vmatpush2.bf16.msra.mxu0 0
        %202 = vmatprep.subr.bf16.mxu0 0
        %203 = vmatpush2.bf16.msra.mxu0 0
        %204 = vmatprep.subr.bf16.mxu0 0
        %205 = vmatpush2.bf16.msra.mxu0 0
        %206 = vmatprep.subr.bf16.mxu0 0
        %207 = vmatpush2.bf16.msra.mxu0 0
        %208 = vmatprep.subr.bf16.mxu0 0
        %209 = vmatpush2.bf16.msra.mxu0 0
        %210 = vmatprep.subr.bf16.mxu0 0
        %211 = vmatpush2.bf16.msra.mxu0 0
        %212 = vmatprep.mubr.bf16.mxu0 0
        %213 = vmatmul.mubr.bf16.gmra.mxu0 %v169
        %v214 = vpop.f32.mrf.mxu0
        %v215 = vadd.f32 0.0, %v214
        %v216 = vpop.f32.mrf.mxu0
        %v217 = vpop.f32.mrf.mxu0
        %v218 = vadd.f32 0.0, %v217
        %v219 = vpop.f32.mrf.mxu0
        %220 = vmatprep.mubr.bf16.mxu0 0
        %221 = vmatmul.mubr.bf16.gmra.mxu0 %v172
        %v222 = vpop.f32.mrf.mxu0
        %v223 = vadd.f32 0.0, %v222
        %v224 = vpop.f32.mrf.mxu0
        %v225 = vpop.f32.mrf.mxu0
        %v226 = vadd.f32 0.0, %v225
        %v227 = vpop.f32.mrf.mxu0
        %228 = vmatprep.mubr.bf16.mxu0 0
        %229 = vmatmul.mubr.bf16.gmra.mxu0 %v175
        %v230 = vpop.f32.mrf.mxu0
        %v231 = vadd.f32 0.0, %v230
        %v232 = vpop.f32.mrf.mxu0
        %v233 = vpop.f32.mrf.mxu0
        %v234 = vadd.f32 0.0, %v233
        %v235 = vpop.f32.mrf.mxu0
        %236 = vmatprep.mubr.bf16.mxu0 0
        %237 = vmatmul.mubr.bf16.gmra.mxu0 %v178
        %v238 = vpop.f32.mrf.mxu0
        %v239 = vadd.f32 0.0, %v238
        %v240 = vpop.f32.mrf.mxu0
        %v241 = vpop.f32.mrf.mxu0
        %v242 = vadd.f32 0.0, %v241
        %v243 = vpop.f32.mrf.mxu0
        %244 = vdwg.mxu0
        %v245 = vpack.c.bf16 %v218, %v215
        %v246 = vpack.c.bf16 %v226, %v223
        %v247 = vpack.c.bf16 %v234, %v231
        %v248 = vpack.c.bf16 %v242, %v239
        %v253 = vunpack.c.l.b16 %v245
        %v254 = vunpack.c.h.b16 %v245
        %v255 = vunpack.c.l.b16 %v246
        %v256 = vunpack.c.h.b16 %v246
        %v257 = vunpack.c.l.b16 %v247
        %v258 = vunpack.c.h.b16 %v247
        %v259 = vunpack.c.l.b16 %v248
        %v260 = vunpack.c.h.b16 %v248
        %v261 = vpack.c.b16 %v253, %v253
        %v262 = vpack.c.b16 %v254, %v254
        %v263 = vpack.c.b16 %v255, %v255
        %v264 = vpack.c.b16 %v256, %v256
        %v265 = vpack.c.b16 %v257, %v257
        %v266 = vpack.c.b16 %v258, %v258
        %v267 = vpack.c.b16 %v259, %v259
        %v268 = vpack.c.b16 %v260, %v260
        %277 = vst [vmem:[%s137] sm:$0xf] %v261
        %278 = vst [vmem:[%s137 + $0x4] sm:$0xf] %v262
        %279 = vst [vmem:[%s137 + $0x8] sm:$0xf] %v263
        %280 = vst [vmem:[%s137 + $0xc] sm:$0xf] %v264
        %281 = vst [vmem:[%s137 + $0x10] sm:$0xf] %v265
        %282 = vst [vmem:[%s137 + $0x14] sm:$0xf] %v266
        %283 = vst [vmem:[%s137 + $0x18] sm:$0xf] %v267
        %284 = vst [vmem:[%s137 + $0x1c] sm:$0xf] %v268
        %s285 = sand.u32 %s71, 1
        %s286 = scalar_lea.sflag [#allocation3], %s285
        %s287 = sand.u32 %s71, 1
        %s288 = smul.addr %s287, 32
        %s289 = scalar_lea.vmem [#allocation2], %s288
        // Predicated region
        $region29: #{tpu_custom_call.1} parent=27 // pred_check
          %p290 = pneg %p81
        $region30: #{tpu_custom_call.1} parent=27 // pred_check_branch
          %292 = sbr.rel (%p290) target = $region32
        $region31: #{tpu_custom_call.1} parent=27 // pred_region
          %s293 = smul.u32 8, %s16
          %s295 = ssub.s32 512, 512
          %296 = vsyncadd %s286, %s295
          %s297 = smul.addr %s293, 64
          %s298 = scalar_lea.hbm %s2, %s297
          %s299 = sshll.u32 %s289, 4
          %s300 = int_to_ptr.vmem [resolvable:$true] %s299
          %305 = dma.vmem_to_hbm [thread:$0]  %s300, 512, %s298, %s286, 64, 64, 4
        $region32: #{tpu_custom_call.1} parent=27 // pred_fallthru
          _
      $region28: #{tpu_custom_call.1} parent=5 // pred_fallthru
        _
      %p306 = scmp.le.s32.totalorder 2, %s11
      // Predicated region
      $region33: #{tpu_custom_call.1} parent=5 // pred_check
        %p307 = pneg %p306
      $region34: #{tpu_custom_call.1} parent=5 // pred_check_branch
        %309 = sbr.rel (%p307) target = $region36
      $region35: #{tpu_custom_call.1} parent=5 // pred_region
        %s310 = ssub.s32 %s11, 2
        // Predicated region
        $region37: #{tpu_custom_call.1} parent=35 // pred_check
          %p311 = pneg %p87
        $region38: #{tpu_custom_call.1} parent=35 // pred_check_branch
          %313 = sbr.rel (%p311) target = $region40
        $region39: #{tpu_custom_call.1} parent=35 // pred_region
          %s314 = sand.u32 %s72, 1
          %s315 = scalar_lea.sflag [#allocation3], %s314
          %s316 = sand.u32 %s72, 1
          %s317 = smul.addr %s316, 32
          %s318 = scalar_lea.vmem [#allocation2], %s317
          %319 = dma.done %s315, 512
        $region40: #{tpu_custom_call.1} parent=35 // pred_fallthru
          _
      $region36: #{tpu_custom_call.1} parent=5 // pred_fallthru
        _
    $region6: #{tpu_custom_call.1} parent=1 // loop_footer
      %s15 = sadd.s32 1, %s11
    $region7: #{tpu_custom_call.1} parent=1 // loop_footer_branch
      %10 = sbr.rel target = $region3
    $region8: #{tpu_custom_call.1} parent=1 // loop_exit
      _
    %320 = vsyncpa [#allocation3], 1
    %s321 = scalar_lea.sflag [#allocation3], 1
    %322 = vsyncpa %s321, 1

</llo_original>
